<compile_context>
chip_gen: v6e
topology: v6e:2x2x1
jax: 0.10.0
libtpu: 0.0.40
codegen_flags: <defaults>
</compile_context>

<pallas_src>
import jax
import jax.numpy as jnp
from jax import lax
from jax.experimental import pallas as pl
from jax.experimental.pallas import tpu as pltpu

LANE = 128
SUBLANE = 8
MAX_TB = 256


def _round_up(x, m):
    return (x + m - 1) // m * m


def seq_transformer_kernel(ids_ref, tabw1_ref, b1_ref, w2_ref, b2_ref, out_ref):
    # ids_ref   : (TB, S)   int32  token ids (0 == padding_idx)
    # tabw1_ref : (Vp, Hp)  f32    fused (embedding_table @ W1); row 0 zeroed
    # b1_ref    : (1, Hp)   f32    zero-padded bias 1
    # w2_ref    : (Hp, Hp)  f32    zero-padded W2
    # b2_ref    : (1, Hp)   f32    zero-padded bias 2
    # out_ref   : (TB, Hp)  f32    lane-dense (Hp == 128) output slab
    ids = ids_ref[...]
    tb, s = ids.shape
    vp = tabw1_ref.shape[0]

    # ---- AWE encoder: per-vocab hit counts via a short unrolled S-loop ------
    lane_iota = lax.broadcasted_iota(jnp.int32, (1, vp), 1)          # (1, Vp)
    counts = jnp.zeros((tb, vp), jnp.float32)
    for si in range(s):                                              # S is static, small
        counts = counts + (ids[:, si:si + 1] == lane_iota).astype(jnp.float32)

    # Number of non-padding tokens per row: S minus padding-token hits (col 0).
    n_tok = jnp.float32(s) - counts[:, 0:1]                          # (TB, 1)
    inv = 1.0 / jnp.maximum(n_tok, 1.0)                              # exact reciprocal

    # ---- pooled-through-W1 in one matmul (W1 pre-fused into the table) ------
    # (counts @ tab) @ W1 == counts @ (tab @ W1); padding row of tab is zero.
    h = jnp.dot(counts, tabw1_ref[...], preferred_element_type=jnp.float32)
    h = jnp.maximum(h * inv + b1_ref[...], 0.0)                      # mean-scale + ReLU

    # ---- second MLP layer ----------------------------------------------------
    o = jnp.dot(h, w2_ref[...], preferred_element_type=jnp.float32)
    out_ref[...] = jnp.maximum(o + b2_ref[...], 0.0)


def seq_transformer_forward(token_ids, embedding_table, w1, b1, w2, b2):
    """Forward pass equivalent to SeqTransformer(args)(model_input) for the
    'random' (AWEEncoder) encoder choice."""
    B, S = token_ids.shape
    V, D = embedding_table.shape
    H1 = w1.shape[1]
    H2 = w2.shape[1]

    # --- zero-pad to TPU-friendly shapes (keeps the math exact) --------------
    Vp = _round_up(max(V, LANE), LANE)
    Hp = LANE
    assert H1 <= Hp and H2 <= Hp, (H1, H2)

    # Zero the padding row (id 0) explicitly so padding tokens contribute
    # nothing through the count-matrix matmul (replaces the in-kernel mask).
    tab = embedding_table.astype(jnp.float32).at[0, :].set(0.0)
    tab_p = jnp.zeros((Vp, D), jnp.float32).at[:V, :].set(tab)
    w1_p = jnp.zeros((D, Hp), jnp.float32).at[:, :H1].set(w1)
    # Fuse W1 into the table once, outside the kernel (exact by associativity).
    tab_w1 = jnp.dot(tab_p, w1_p, preferred_element_type=jnp.float32)  # (Vp, Hp)

    b1_p = jnp.zeros((1, Hp), jnp.float32).at[:, :H1].set(b1.reshape(1, -1))
    w2_p = jnp.zeros((Hp, Hp), jnp.float32).at[:H1, :H2].set(w2)
    b2_p = jnp.zeros((1, Hp), jnp.float32).at[:, :H2].set(b2.reshape(1, -1))

    # --- adaptive batch tiling ------------------------------------------------
    # >=2 grid steps when B > 8 (so both v7x TensorCores get work under the
    # "parallel" semantics), TB capped at 256 so the (TB, Vp) count tile stays
    # inside the 64-vreg file, and batch padding waste stays < TB rows.
    if B <= SUBLANE:
        TB = SUBLANE
    else:
        n_steps = max(2, pl.cdiv(B, MAX_TB))
        TB = _round_up(pl.cdiv(B, n_steps), SUBLANE)
    Bp = _round_up(B, TB)
    ids_p = jnp.zeros((Bp, S), jnp.int32).at[:B, :].set(token_ids)

    cost = pl.CostEstimate(
        flops=2 * Bp * (Vp * Hp + Hp * Hp),
        transcendentals=0,
        bytes_accessed=(ids_p.size * 4 + tab_w1.size * 4 + w2_p.size * 4 +
                        2 * Hp * 4 + Bp * Hp * 4),
    )

    out = pl.pallas_call(
        seq_transformer_kernel,
        out_shape=jax.ShapeDtypeStruct((Bp, Hp), jnp.float32),
        grid_spec=pltpu.PrefetchScalarGridSpec(
            num_scalar_prefetch=0,
            grid=(Bp // TB,),
            in_specs=[
                pl.BlockSpec((TB, S), lambda i: (i, 0)),     # token ids (tiled)
                pl.BlockSpec((Vp, Hp), lambda i: (0, 0)),    # fused tab@W1 (resident)
                pl.BlockSpec((1, Hp), lambda i: (0, 0)),     # b1
                pl.BlockSpec((Hp, Hp), lambda i: (0, 0)),    # w2
                pl.BlockSpec((1, Hp), lambda i: (0, 0)),     # b2
            ],
            out_specs=pl.BlockSpec((TB, Hp), lambda i: (i, 0)),
        ),
        compiler_params=pltpu.CompilerParams(
            dimension_semantics=("parallel",),
            vmem_limit_bytes=32 * 1024 * 1024,
        ),
        cost_estimate=cost,
    )(ids_p, tab_w1, b1_p, w2_p, b2_p)

    return out[:B, :H2]


def seq_transformer_reference(token_ids, embedding_table, w1, b1, w2, b2):
    """Pure-JAX reference (matches the PyTorch forward semantics)."""
    emb = jnp.take(embedding_table, token_ids, axis=0)               # (B, S, D)
    mask = (token_ids != 0).astype(jnp.float32)
    summed = jnp.sum(emb * mask[:, :, None], axis=1)
    count = jnp.maximum(jnp.sum(mask, axis=1, keepdims=True), 1.0)
    pooled = summed / count
    h = jnp.maximum(pooled @ w1 + b1, 0.0)
    return jnp.maximum(h @ w2 + b2, 0.0)


def init_params(key, vocab_length, enc_out_dim, hidden_dims):
    """Deterministic parameter init (synthetic; not loaded from checkpoint)."""
    k_emb, k_w1, k_b1, k_w2, k_b2 = jax.random.split(key, 5)
    emb_table = jax.random.normal(
        k_emb, (vocab_length, enc_out_dim), jnp.float32) * 0.02
    # padding_idx=0 -> zero row (frozen random embeddings otherwise)
    emb_table = emb_table.at[0].set(0.0)

    h1, h2 = hidden_dims
    w1 = jax.random.normal(k_w1, (enc_out_dim, h1), jnp.float32) * 0.02
    b1 = jax.random.normal(k_b1, (1, h1), jnp.float32) * 0.02
    w2 = jax.random.normal(k_w2, (h1, h2), jnp.float32) * 0.02
    b2 = jax.random.normal(k_b2, (1, h2), jnp.float32) * 0.02
    return emb_table, w1, b1, w2, b2


if __name__ == "__main__":
    # args: encoder_name='random', vocab_length=100, hidden_dims=[64, 32],
    #       act_fn='ReLU'; AWEEncoder out_dim=768 (hard-coded in the module).
    VOCAB = 100
    ENC_OUT = 768
    HIDDEN_DIMS = (64, 32)
    B, S = 2, 8

    key = jax.random.PRNGKey(0)
    k_ids, k_params = jax.random.split(key)

    emb_table, w1, b1, w2, b2 = init_params(
        k_params, VOCAB, ENC_OUT, HIDDEN_DIMS)

    # model_input: token ids; trailing zeros exercise the padding mask.
    token_ids = jax.random.randint(k_ids, (B, S), 1, VOCAB, dtype=jnp.int32)
    token_ids = token_ids.at[:, -2:].set(0)

    # TODO(synk): TransformerEncoder (pretrained BERT) branch of SeqTransformer
    # has no in-script equivalent; only the 'random' AWEEncoder path is built.
    y = seq_transformer_forward(token_ids, emb_table, w1, b1, w2, b2)
    y = jax.block_until_ready(y)
    assert y.shape == (B, HIDDEN_DIMS[-1]), y.shape

    y_ref = seq_transformer_reference(token_ids, emb_table, w1, b1, w2, b2)
    assert jnp.allclose(y, y_ref, atol=1e-5, rtol=1e-4), \
        float(jnp.max(jnp.abs(y - y_ref)))

    print("KERNEL_OK")
</pallas_src>

<mosaic_0001>
module attributes {stable_mosaic.version = 11 : i64} {
  func.func @seq_transformer_kernel(%arg0: i32, %arg1: memref<8x8xi32, #tpu.memory_space<vmem>>, %arg2: memref<128x128xf32, #tpu.memory_space<vmem>>, %arg3: memref<1x128xf32, #tpu.memory_space<vmem>>, %arg4: memref<128x128xf32, #tpu.memory_space<vmem>>, %arg5: memref<1x128xf32, #tpu.memory_space<vmem>>, %arg6: memref<8x128xf32, #tpu.memory_space<vmem>>) attributes {dimension_semantics = [#tpu.dimension_semantics<parallel>], iteration_bounds = array<i64: 1>, scalar_prefetch = 0 : i64, scratch_operands = 0 : i64, tpu.core_type = #tpu.core_type<tc>, window_params = [{transform_indices = @transform_0, window_bounds = array<i64: 8, 8>}, {pipeline_mode = #tpu.pipeline_mode<synchronous>, transform_indices = @transform_1, window_bounds = array<i64: 128, 128>}, {pipeline_mode = #tpu.pipeline_mode<synchronous>, transform_indices = @transform_2, window_bounds = array<i64: 1, 128>}, {pipeline_mode = #tpu.pipeline_mode<synchronous>, transform_indices = @transform_3, window_bounds = array<i64: 128, 128>}, {pipeline_mode = #tpu.pipeline_mode<synchronous>, transform_indices = @transform_4, window_bounds = array<i64: 1, 128>}, {transform_indices = @transform_5, window_bounds = array<i64: 8, 128>}]} {
    %c0 = arith.constant 0 : index
    %c0_0 = arith.constant 0 : index
    %0 = vector.load %arg1[%c0, %c0_0] : memref<8x8xi32, #tpu.memory_space<vmem>>, vector<8x8xi32>
    %1 = tpu.iota {dimensions = array<i32: 1>} : vector<1x128xi32>
    %cst = arith.constant 0.000000e+00 : f32
    %2 = vector.broadcast %cst : f32 to vector<8x128xf32>
    %3 = vector.extract_strided_slice %0 {offsets = [0, 0], sizes = [8, 1], strides = [1, 1]} : vector<8x8xi32> to vector<8x1xi32>
    %4 = vector.broadcast %3 : vector<8x1xi32> to vector<8x128xi32>
    %5 = vector.broadcast %1 : vector<1x128xi32> to vector<8x128xi32>
    %6 = arith.cmpi eq, %4, %5 : vector<8x128xi32>
    %7 = arith.extui %6 : vector<8x128xi1> to vector<8x128xi32>
    %8 = arith.sitofp %7 : vector<8x128xi32> to vector<8x128xf32>
    %9 = arith.addf %2, %8 : vector<8x128xf32>
    %10 = vector.extract_strided_slice %0 {offsets = [0, 1], sizes = [8, 1], strides = [1, 1]} : vector<8x8xi32> to vector<8x1xi32>
    %11 = vector.broadcast %10 : vector<8x1xi32> to vector<8x128xi32>
    %12 = vector.broadcast %1 : vector<1x128xi32> to vector<8x128xi32>
    %13 = arith.cmpi eq, %11, %12 : vector<8x128xi32>
    %14 = arith.extui %13 : vector<8x128xi1> to vector<8x128xi32>
    %15 = arith.sitofp %14 : vector<8x128xi32> to vector<8x128xf32>
    %16 = arith.addf %9, %15 : vector<8x128xf32>
    %17 = vector.extract_strided_slice %0 {offsets = [0, 2], sizes = [8, 1], strides = [1, 1]} : vector<8x8xi32> to vector<8x1xi32>
    %18 = vector.broadcast %17 : vector<8x1xi32> to vector<8x128xi32>
    %19 = vector.broadcast %1 : vector<1x128xi32> to vector<8x128xi32>
    %20 = arith.cmpi eq, %18, %19 : vector<8x128xi32>
    %21 = arith.extui %20 : vector<8x128xi1> to vector<8x128xi32>
    %22 = arith.sitofp %21 : vector<8x128xi32> to vector<8x128xf32>
    %23 = arith.addf %16, %22 : vector<8x128xf32>
    %24 = vector.extract_strided_slice %0 {offsets = [0, 3], sizes = [8, 1], strides = [1, 1]} : vector<8x8xi32> to vector<8x1xi32>
    %25 = vector.broadcast %24 : vector<8x1xi32> to vector<8x128xi32>
    %26 = vector.broadcast %1 : vector<1x128xi32> to vector<8x128xi32>
    %27 = arith.cmpi eq, %25, %26 : vector<8x128xi32>
    %28 = arith.extui %27 : vector<8x128xi1> to vector<8x128xi32>
    %29 = arith.sitofp %28 : vector<8x128xi32> to vector<8x128xf32>
    %30 = arith.addf %23, %29 : vector<8x128xf32>
    %31 = vector.extract_strided_slice %0 {offsets = [0, 4], sizes = [8, 1], strides = [1, 1]} : vector<8x8xi32> to vector<8x1xi32>
    %32 = vector.broadcast %31 : vector<8x1xi32> to vector<8x128xi32>
    %33 = vector.broadcast %1 : vector<1x128xi32> to vector<8x128xi32>
    %34 = arith.cmpi eq, %32, %33 : vector<8x128xi32>
    %35 = arith.extui %34 : vector<8x128xi1> to vector<8x128xi32>
    %36 = arith.sitofp %35 : vector<8x128xi32> to vector<8x128xf32>
    %37 = arith.addf %30, %36 : vector<8x128xf32>
    %38 = vector.extract_strided_slice %0 {offsets = [0, 5], sizes = [8, 1], strides = [1, 1]} : vector<8x8xi32> to vector<8x1xi32>
    %39 = vector.broadcast %38 : vector<8x1xi32> to vector<8x128xi32>
    %40 = vector.broadcast %1 : vector<1x128xi32> to vector<8x128xi32>
    %41 = arith.cmpi eq, %39, %40 : vector<8x128xi32>
    %42 = arith.extui %41 : vector<8x128xi1> to vector<8x128xi32>
    %43 = arith.sitofp %42 : vector<8x128xi32> to vector<8x128xf32>
    %44 = arith.addf %37, %43 : vector<8x128xf32>
    %45 = vector.extract_strided_slice %0 {offsets = [0, 6], sizes = [8, 1], strides = [1, 1]} : vector<8x8xi32> to vector<8x1xi32>
    %46 = vector.broadcast %45 : vector<8x1xi32> to vector<8x128xi32>
    %47 = vector.broadcast %1 : vector<1x128xi32> to vector<8x128xi32>
    %48 = arith.cmpi eq, %46, %47 : vector<8x128xi32>
    %49 = arith.extui %48 : vector<8x128xi1> to vector<8x128xi32>
    %50 = arith.sitofp %49 : vector<8x128xi32> to vector<8x128xf32>
    %51 = arith.addf %44, %50 : vector<8x128xf32>
    %52 = vector.extract_strided_slice %0 {offsets = [0, 7], sizes = [8, 1], strides = [1, 1]} : vector<8x8xi32> to vector<8x1xi32>
    %53 = vector.broadcast %52 : vector<8x1xi32> to vector<8x128xi32>
    %54 = vector.broadcast %1 : vector<1x128xi32> to vector<8x128xi32>
    %55 = arith.cmpi eq, %53, %54 : vector<8x128xi32>
    %56 = arith.extui %55 : vector<8x128xi1> to vector<8x128xi32>
    %57 = arith.sitofp %56 : vector<8x128xi32> to vector<8x128xf32>
    %58 = arith.addf %51, %57 : vector<8x128xf32>
    %59 = vector.extract_strided_slice %58 {offsets = [0, 0], sizes = [8, 1], strides = [1, 1]} : vector<8x128xf32> to vector<8x1xf32>
    %cst_1 = arith.constant 8.000000e+00 : f32
    %60 = vector.broadcast %cst_1 : f32 to vector<8x1xf32>
    %61 = arith.subf %60, %59 : vector<8x1xf32>
    %cst_2 = arith.constant 1.000000e+00 : f32
    %62 = vector.broadcast %cst_2 : f32 to vector<8x1xf32>
    %63 = arith.maximumf %61, %62 : vector<8x1xf32>
    %cst_3 = arith.constant 1.000000e+00 : f32
    %64 = vector.broadcast %cst_3 : f32 to vector<8x1xf32>
    %65 = arith.divf %64, %63 : vector<8x1xf32>
    %c0_4 = arith.constant 0 : index
    %c0_5 = arith.constant 0 : index
    %66 = vector.load %arg2[%c0_4, %c0_5] : memref<128x128xf32, #tpu.memory_space<vmem>>, vector<128x128xf32>
    %cst_6 = arith.constant dense<0.000000e+00> : vector<8x128xf32>
    %67 = tpu.matmul %58, %66, %cst_6 {dimension_numbers = #tpu.dot_dimension_numbers<[1], [0], [0], [1], [0, 0, 1, 1], [], []>} : vector<8x128xf32>, vector<128x128xf32>, vector<8x128xf32> -> vector<8x128xf32>
    %68 = vector.broadcast %65 : vector<8x1xf32> to vector<8x128xf32>
    %69 = arith.mulf %67, %68 : vector<8x128xf32>
    %c0_7 = arith.constant 0 : index
    %c0_8 = arith.constant 0 : index
    %70 = vector.load %arg3[%c0_7, %c0_8] : memref<1x128xf32, #tpu.memory_space<vmem>>, vector<1x128xf32>
    %71 = vector.broadcast %70 : vector<1x128xf32> to vector<8x128xf32>
    %72 = arith.addf %69, %71 : vector<8x128xf32>
    %cst_9 = arith.constant 0.000000e+00 : f32
    %73 = vector.broadcast %cst_9 : f32 to vector<8x128xf32>
    %74 = arith.maximumf %72, %73 : vector<8x128xf32>
    %c0_10 = arith.constant 0 : index
    %c0_11 = arith.constant 0 : index
    %75 = vector.load %arg4[%c0_10, %c0_11] : memref<128x128xf32, #tpu.memory_space<vmem>>, vector<128x128xf32>
    %cst_12 = arith.constant dense<0.000000e+00> : vector<8x128xf32>
    %76 = tpu.matmul %74, %75, %cst_12 {dimension_numbers = #tpu.dot_dimension_numbers<[1], [0], [0], [1], [0, 0, 1, 1], [], []>} : vector<8x128xf32>, vector<128x128xf32>, vector<8x128xf32> -> vector<8x128xf32>
    %c0_13 = arith.constant 0 : index
    %c0_14 = arith.constant 0 : index
    %77 = vector.load %arg5[%c0_13, %c0_14] : memref<1x128xf32, #tpu.memory_space<vmem>>, vector<1x128xf32>
    %78 = vector.broadcast %77 : vector<1x128xf32> to vector<8x128xf32>
    %79 = arith.addf %76, %78 : vector<8x128xf32>
    %cst_15 = arith.constant 0.000000e+00 : f32
    %80 = vector.broadcast %cst_15 : f32 to vector<8x128xf32>
    %81 = arith.maximumf %79, %80 : vector<8x128xf32>
    %c0_16 = arith.constant 0 : index
    %c0_17 = arith.constant 0 : index
    %82 = vector.load %arg6[%c0_16, %c0_17] : memref<8x128xf32, #tpu.memory_space<vmem>>, vector<8x128xf32>
    tpu.vector_store %arg6[%c0_16, %c0_17], %81 {strides = array<i32>} : memref<8x128xf32, #tpu.memory_space<vmem>>, vector<8x128xf32>,
    return
  }
  func.func @transform_0(%arg0: i32) -> (i32, i32) {
    %c0_i32 = arith.constant 0 : i32
    %c0_i32_0 = arith.constant 0 : i32
    return %arg0, %c0_i32 : i32, i32
  }
  func.func @transform_1(%arg0: i32) -> (i32, i32) {
    %c0_i32 = arith.constant 0 : i32
    %c0_i32_0 = arith.constant 0 : i32
    %c0_i32_1 = arith.constant 0 : i32
    return %c0_i32, %c0_i32_0 : i32, i32
  }
  func.func @transform_2(%arg0: i32) -> (i32, i32) {
    %c0_i32 = arith.constant 0 : i32
    %c0_i32_0 = arith.constant 0 : i32
    %c0_i32_1 = arith.constant 0 : i32
    return %c0_i32, %c0_i32_0 : i32, i32
  }
  func.func @transform_3(%arg0: i32) -> (i32, i32) {
    %c0_i32 = arith.constant 0 : i32
    %c0_i32_0 = arith.constant 0 : i32
    %c0_i32_1 = arith.constant 0 : i32
    return %c0_i32, %c0_i32_0 : i32, i32
  }
  func.func @transform_4(%arg0: i32) -> (i32, i32) {
    %c0_i32 = arith.constant 0 : i32
    %c0_i32_0 = arith.constant 0 : i32
    %c0_i32_1 = arith.constant 0 : i32
    return %c0_i32, %c0_i32_0 : i32, i32
  }
  func.func @transform_5(%arg0: i32) -> (i32, i32) {
    %c0_i32 = arith.constant 0 : i32
    %c0_i32_0 = arith.constant 0 : i32
    return %arg0, %c0_i32 : i32, i32
  }
}

</mosaic_0001>

<llo_original>
// kernel: tpu_custom_call.1
$region0: #{tpu_custom_call.1}
  #allocation0 [shape = 'u32[]', space=smem, size = 0x4, offset = 0x4, fixed_abs, tag = 'smem constant byte address 0x4 - core index']
  #allocation1 [shape = 'u32[144,128]{1,0:T(1,128)}', space=vmem, size = 0x12000, scoped, tag = 'internal scratch']
  %s0 = inlined_call_operand.hbm [shape: s32[8,8], index: 0, kind: input, shape index: {}]
  %s1 = inlined_call_operand.hbm [shape: f32[128,128], index: 1, kind: input, shape index: {}]
  %s2 = inlined_call_operand.vmem [shape: f32[1,128], index: 2, kind: input, shape index: {}]
  %s3 = inlined_call_operand.hbm [shape: f32[128,128], index: 3, kind: input, shape index: {}]
  %s4 = inlined_call_operand.vmem [shape: f32[1,128], index: 4, kind: input, shape index: {}]
  %s5 = inlined_call_operand.hbm [shape: f32[8,128], index: 5, kind: output, shape index: {}]
  %s6 = sld [smem:[#allocation0]]
  $region42: #{tpu_custom_call.1} parent=0
    _
  %s8 = ssub.s32 1, %s6
  %s9 = scalar_select 0, %s8, %s6
  $region1: #{tpu_custom_call.1} parent=0
    #allocation2 [shape = 'u8[4096]{0}', space=vmem, size = 0x1000, scoped, tag = 'input window, operand 0, single buffered']
    #allocation3 [shape = 's32[1]{0}', space=sflag, size = 0x4, scoped, tag = 'scoped memory for tpu_custom_call.1']
    #allocation4 [shape = 's32[1]{0}', space=sflag, size = 0x4, scoped, tag = 'scoped memory for tpu_custom_call.1']
    #allocation5 [shape = 'u8[65536]{0}', space=vmem, size = 0x10000, scoped, tag = 'input window, operand 1, single buffered']
    #allocation6 [shape = 's32[1]{0}', space=sflag, size = 0x4, scoped, tag = 'scoped memory for tpu_custom_call.1']
    #allocation7 [shape = 'u8[65536]{0}', space=vmem, size = 0x10000, scoped, tag = 'input window, operand 3, single buffered']
    #allocation8 [shape = 'u8[4096]{0}', space=vmem, size = 0x1000, scoped, tag = 'output window, operand 0, single buffered']
    %10 = vsyncpa [#allocation3], 0
    %11 = vsyncpa [#allocation6], 0
    %12 = vsyncpa [#allocation4], 0
    // Predicated region
    $region2: #{tpu_custom_call.1} parent=1 // pred_check
      _
    $region3: #{tpu_custom_call.1} parent=1 // pred_check_branch
      %14 = sbr.rel (0) target = $region5
    $region4: #{tpu_custom_call.1} parent=1 // pred_region
      %s16 = ssub.s32 128, 128
      %17 = vsyncadd [#allocation3], %s16
      %s19 = sshll.u32 [#allocation2], 4
      %s20 = int_to_ptr.vmem [resolvable:$true] %s19
      %22 = dma.hbm_to_vmem [thread:$0]  %s0, 128, %s20, [#allocation3]
    $region5: #{tpu_custom_call.1} parent=1 // pred_fallthru
      _
    // Predicated region
    $region6: #{tpu_custom_call.1} parent=1 // pred_check
      _
    $region7: #{tpu_custom_call.1} parent=1 // pred_check_branch
      %24 = sbr.rel (0) target = $region9
    $region8: #{tpu_custom_call.1} parent=1 // pred_region
      %s26 = ssub.s32 2048, 2048
      %27 = vsyncadd [#allocation6], %s26
      %s28 = sshll.u32 [#allocation5], 4
      %s29 = int_to_ptr.vmem [resolvable:$true] %s28
      %34 = dma.hbm_to_vmem [thread:$0]  %s1, 2048, %s29, [#allocation6], 128, 128, 8
    $region9: #{tpu_custom_call.1} parent=1 // pred_fallthru
      _
    // Predicated region
    $region10: #{tpu_custom_call.1} parent=1 // pred_check
      _
    $region11: #{tpu_custom_call.1} parent=1 // pred_check_branch
      %36 = sbr.rel (0) target = $region13
    $region12: #{tpu_custom_call.1} parent=1 // pred_region
      _
    $region13: #{tpu_custom_call.1} parent=1 // pred_fallthru
      _
    // Predicated region
    $region14: #{tpu_custom_call.1} parent=1 // pred_check
      _
    $region15: #{tpu_custom_call.1} parent=1 // pred_check_branch
      %38 = sbr.rel (0) target = $region17
    $region16: #{tpu_custom_call.1} parent=1 // pred_region
      %s40 = ssub.s32 2048, 2048
      %41 = vsyncadd [#allocation6], %s40
      %s42 = sshll.u32 [#allocation7], 4
      %s43 = int_to_ptr.vmem [resolvable:$true] %s42
      %48 = dma.hbm_to_vmem [thread:$0]  %s3, 2048, %s43, [#allocation6], 128, 128, 8
    $region17: #{tpu_custom_call.1} parent=1 // pred_fallthru
      _
    // Predicated region
    $region18: #{tpu_custom_call.1} parent=1 // pred_check
      _
    $region19: #{tpu_custom_call.1} parent=1 // pred_check_branch
      %50 = sbr.rel (0) target = $region21
    $region20: #{tpu_custom_call.1} parent=1 // pred_region
      _
    $region21: #{tpu_custom_call.1} parent=1 // pred_fallthru
      _
    // Predicated region
    $region22: #{tpu_custom_call.1} parent=1 // pred_check
      _
    $region23: #{tpu_custom_call.1} parent=1 // pred_check_branch
      %52 = sbr.rel (0) target = $region25
    $region24: #{tpu_custom_call.1} parent=1 // pred_region
      %53 = dma.done [#allocation3], 128
    $region25: #{tpu_custom_call.1} parent=1 // pred_fallthru
      _
    // Predicated region
    $region26: #{tpu_custom_call.1} parent=1 // pred_check
      _
    $region27: #{tpu_custom_call.1} parent=1 // pred_check_branch
      %55 = sbr.rel (0) target = $region29
    $region28: #{tpu_custom_call.1} parent=1 // pred_region
      %56 = dma.done [#allocation6], 2048
    $region29: #{tpu_custom_call.1} parent=1 // pred_fallthru
      _
    // Predicated region
    $region30: #{tpu_custom_call.1} parent=1 // pred_check
      _
    $region31: #{tpu_custom_call.1} parent=1 // pred_check_branch
      %58 = sbr.rel (0) target = $region33
    $region32: #{tpu_custom_call.1} parent=1 // pred_region
      %59 = dma.done [#allocation6], 2048
    $region33: #{tpu_custom_call.1} parent=1 // pred_fallthru
      _
    %v60 = vld [vmem:[#allocation2] sm:$0xff]
    %v61 = vlaneseq
    %v62 = vand.u32 %v61, 127
    %63 = vset.pattern.permute.xlu0 0
    %64 = vperm.xlu0 %63, %v60
    %v65 = vpop.permute.xlu0 %64
    %vm66 = vcmp.eq.s32.totalorder %v65, %v62
    %v67 = vsel %vm66, 1, 0
    %v68 = vcvt.s32.f32 %v67
    %v69 = vadd.f32 %v68, 0.0
    %70 = vset.pattern.permute.xlu0 1
    %71 = vperm.xlu0 %70, %v60
    %v72 = vpop.permute.xlu0 %71
    %vm73 = vcmp.eq.s32.totalorder %v72, %v62
    %v74 = vsel %vm73, 1, 0
    %v75 = vcvt.s32.f32 %v74
    %v76 = vadd.f32 %v69, %v75
    %77 = vset.pattern.permute.xlu0 2
    %78 = vperm.xlu0 %77, %v60
    %v79 = vpop.permute.xlu0 %78
    %vm80 = vcmp.eq.s32.totalorder %v79, %v62
    %v81 = vsel %vm80, 1, 0
    %v82 = vcvt.s32.f32 %v81
    %v83 = vadd.f32 %v76, %v82
    %84 = vset.pattern.permute.xlu0 3
    %85 = vperm.xlu0 %84, %v60
    %v86 = vpop.permute.xlu0 %85
    %vm87 = vcmp.eq.s32.totalorder %v86, %v62
    %v88 = vsel %vm87, 1, 0
    %v89 = vcvt.s32.f32 %v88
    %v90 = vadd.f32 %v83, %v89
    %91 = vset.pattern.permute.xlu0 4
    %92 = vperm.xlu0 %91, %v60
    %v93 = vpop.permute.xlu0 %92
    %vm94 = vcmp.eq.s32.totalorder %v93, %v62
    %v95 = vsel %vm94, 1, 0
    %v96 = vcvt.s32.f32 %v95
    %v97 = vadd.f32 %v90, %v96
    %98 = vset.pattern.permute.xlu0 5
    %99 = vperm.xlu0 %98, %v60
    %v100 = vpop.permute.xlu0 %99
    %vm101 = vcmp.eq.s32.totalorder %v100, %v62
    %v102 = vsel %vm101, 1, 0
    %v103 = vcvt.s32.f32 %v102
    %v104 = vadd.f32 %v97, %v103
    %105 = vset.pattern.permute.xlu0 6
    %106 = vperm.xlu0 %105, %v60
    %v107 = vpop.permute.xlu0 %106
    %vm108 = vcmp.eq.s32.totalorder %v107, %v62
    %v109 = vsel %vm108, 1, 0
    %v110 = vcvt.s32.f32 %v109
    %v111 = vadd.f32 %v104, %v110
    %112 = vset.pattern.permute.xlu0 7
    %113 = vperm.xlu0 %112, %v60
    %v114 = vpop.permute.xlu0 %113
    %vm115 = vcmp.eq.s32.totalorder %v114, %v62
    %v116 = vsel %vm115, 1, 0
    %v117 = vcvt.s32.f32 %v116
    %v118 = vadd.f32 %v111, %v117
    %v119 = vsub.f32 8.0, %v118
    %v120 = vmax.f32 %v119, 1.0
    %v121 = vrcp.pop %v120
    %v122 = vmul.f32 1.0, %v121
    %v123 = vld [vmem:[#allocation5] sm:$0xff]
    %v124 = vld [vmem:[#allocation5 + $0x8] sm:$0xff]
    %v125 = vld [vmem:[#allocation5 + $0x10] sm:$0xff]
    %v126 = vld [vmem:[#allocation5 + $0x18] sm:$0xff]
    %v127 = vld [vmem:[#allocation5 + $0x20] sm:$0xff]
    %v128 = vld [vmem:[#allocation5 + $0x28] sm:$0xff]
    %v129 = vld [vmem:[#allocation5 + $0x30] sm:$0xff]
    %v130 = vld [vmem:[#allocation5 + $0x38] sm:$0xff]
    %v131 = vld [vmem:[#allocation5 + $0x40] sm:$0xff]
    %v132 = vld [vmem:[#allocation5 + $0x48] sm:$0xff]
    %v133 = vld [vmem:[#allocation5 + $0x50] sm:$0xff]
    %v134 = vld [vmem:[#allocation5 + $0x58] sm:$0xff]
    %v135 = vld [vmem:[#allocation5 + $0x60] sm:$0xff]
    %v136 = vld [vmem:[#allocation5 + $0x68] sm:$0xff]
    %v137 = vld [vmem:[#allocation5 + $0x70] sm:$0xff]
    %v138 = vld [vmem:[#allocation5 + $0x78] sm:$0xff]
    %139 = vmatprep.subr.mxu0 0.0
    %140 = vmatpush1.msra.mxu0 %v138
    %141 = vmatprep.subr.mxu0 0.0
    %142 = vmatpush1.msra.mxu0 %v137
    %143 = vmatprep.subr.mxu0 0.0
    %144 = vmatpush1.msra.mxu0 %v136
    %145 = vmatprep.subr.mxu0 0.0
    %146 = vmatpush1.msra.mxu0 %v135
    %147 = vmatprep.subr.mxu0 0.0
    %148 = vmatpush1.msra.mxu0 %v134
    %149 = vmatprep.subr.mxu0 0.0
    %150 = vmatpush1.msra.mxu0 %v133
    %151 = vmatprep.subr.mxu0 0.0
    %152 = vmatpush1.msra.mxu0 %v132
    %153 = vmatprep.subr.mxu0 0.0
    %154 = vmatpush1.msra.mxu0 %v131
    %155 = vmatprep.subr.mxu0 0.0
    %156 = vmatpush1.msra.mxu0 %v130
    %157 = vmatprep.subr.mxu0 0.0
    %158 = vmatpush1.msra.mxu0 %v129
    %159 = vmatprep.subr.mxu0 0.0
    %160 = vmatpush1.msra.mxu0 %v128
    %161 = vmatprep.subr.mxu0 0.0
    %162 = vmatpush1.msra.mxu0 %v127
    %163 = vmatprep.subr.mxu0 0.0
    %164 = vmatpush1.msra.mxu0 %v126
    %165 = vmatprep.subr.mxu0 0.0
    %166 = vmatpush1.msra.mxu0 %v125
    %167 = vmatprep.subr.mxu0 0.0
    %168 = vmatpush1.msra.mxu0 %v124
    %169 = vmatprep.subr.mxu0 0.0
    %170 = vmatpush1.msra.mxu0 %v123
    %171 = vmatprep.subr.mxu0 0.0
    %172 = vmatpush2.msra.mxu0 0.0
    %173 = vmatprep.subr.mxu0 0.0
    %174 = vmatpush2.msra.mxu0 0.0
    %175 = vmatprep.subr.mxu0 0.0
    %176 = vmatpush2.msra.mxu0 0.0
    %177 = vmatprep.subr.mxu0 0.0
    %178 = vmatpush2.msra.mxu0 0.0
    %179 = vmatprep.subr.mxu0 0.0
    %180 = vmatpush2.msra.mxu0 0.0
    %181 = vmatprep.subr.mxu0 0.0
    %182 = vmatpush2.msra.mxu0 0.0
    %183 = vmatprep.subr.mxu0 0.0
    %184 = vmatpush2.msra.mxu0 0.0
    %185 = vmatprep.subr.mxu0 0.0
    %186 = vmatpush2.msra.mxu0 0.0
    %187 = vmatprep.subr.mxu0 0.0
    %188 = vmatpush2.msra.mxu0 0.0
    %189 = vmatprep.subr.mxu0 0.0
    %190 = vmatpush2.msra.mxu0 0.0
    %191 = vmatprep.subr.mxu0 0.0
    %192 = vmatpush2.msra.mxu0 0.0
    %193 = vmatprep.subr.mxu0 0.0
    %194 = vmatpush2.msra.mxu0 0.0
    %195 = vmatprep.subr.mxu0 0.0
    %196 = vmatpush2.msra.mxu0 0.0
    %197 = vmatprep.subr.mxu0 0.0
    %198 = vmatpush2.msra.mxu0 0.0
    %199 = vmatprep.subr.mxu0 0.0
    %200 = vmatpush2.msra.mxu0 0.0
    %201 = vmatprep.subr.mxu0 0.0
    %202 = vmatpush2.msra.mxu0 0.0
    %203 = vmatprep.mubr.f32.mxu0 0.0
    %204 = vmatmul.mubr.f32.gmra.mxu0 %v118
    %v205 = vpop.f32.mrf.mxu0
    %v206 = vadd.f32 0.0, %v205
    %v207 = vpop.f32.mrf.mxu0
    %208 = vdwg.mxu0
    %210 = vset.pattern.permute.xlu0 0
    %211 = vperm.xlu0 %210, %v122
    %v212 = vpop.permute.xlu0 %211
    %v214 = vmul.f32 %v206, %v212
    %v215 = vld [vmem:[%s2] sm:$0x1]
    %v217 = vlaneseq
    %v218 = vshrl.u32 %v217, 7
    %v219 = vsub.s32 0, %v218
    %v220 = vrot.slane %v215, %v219
    %v222 = vadd.f32 %v214, %v220
    %v223 = vmax.f32 %v222, 0.0
    %v224 = vld [vmem:[#allocation7] sm:$0xff]
    %v225 = vld [vmem:[#allocation7 + $0x8] sm:$0xff]
    %v226 = vld [vmem:[#allocation7 + $0x10] sm:$0xff]
    %v227 = vld [vmem:[#allocation7 + $0x18] sm:$0xff]
    %v228 = vld [vmem:[#allocation7 + $0x20] sm:$0xff]
    %v229 = vld [vmem:[#allocation7 + $0x28] sm:$0xff]
    %v230 = vld [vmem:[#allocation7 + $0x30] sm:$0xff]
    %v231 = vld [vmem:[#allocation7 + $0x38] sm:$0xff]
    %v232 = vld [vmem:[#allocation7 + $0x40] sm:$0xff]
    %v233 = vld [vmem:[#allocation7 + $0x48] sm:$0xff]
    %v234 = vld [vmem:[#allocation7 + $0x50] sm:$0xff]
    %v235 = vld [vmem:[#allocation7 + $0x58] sm:$0xff]
    %v236 = vld [vmem:[#allocation7 + $0x60] sm:$0xff]
    %v237 = vld [vmem:[#allocation7 + $0x68] sm:$0xff]
    %v238 = vld [vmem:[#allocation7 + $0x70] sm:$0xff]
    %v239 = vld [vmem:[#allocation7 + $0x78] sm:$0xff]
    %v240 = vld [vmem:[%s4] sm:$0x1]
    %v242 = vlaneseq
    %v243 = vshrl.u32 %v242, 7
    %v244 = vsub.s32 0, %v243
    %v245 = vrot.slane %v240, %v244
    %247 = vmatprep.subr.mxu0 0.0
    %248 = vmatpush1.msra.mxu0 %v239
    %249 = vmatprep.subr.mxu0 0.0
    %250 = vmatpush1.msra.mxu0 %v238
    %251 = vmatprep.subr.mxu0 0.0
    %252 = vmatpush1.msra.mxu0 %v237
    %253 = vmatprep.subr.mxu0 0.0
    %254 = vmatpush1.msra.mxu0 %v236
    %255 = vmatprep.subr.mxu0 0.0
    %256 = vmatpush1.msra.mxu0 %v235
    %257 = vmatprep.subr.mxu0 0.0
    %258 = vmatpush1.msra.mxu0 %v234
    %259 = vmatprep.subr.mxu0 0.0
    %260 = vmatpush1.msra.mxu0 %v233
    %261 = vmatprep.subr.mxu0 0.0
    %262 = vmatpush1.msra.mxu0 %v232
    %263 = vmatprep.subr.mxu0 0.0
    %264 = vmatpush1.msra.mxu0 %v231
    %265 = vmatprep.subr.mxu0 0.0
    %266 = vmatpush1.msra.mxu0 %v230
    %267 = vmatprep.subr.mxu0 0.0
    %268 = vmatpush1.msra.mxu0 %v229
    %269 = vmatprep.subr.mxu0 0.0
    %270 = vmatpush1.msra.mxu0 %v228
    %271 = vmatprep.subr.mxu0 0.0
    %272 = vmatpush1.msra.mxu0 %v227
    %273 = vmatprep.subr.mxu0 0.0
    %274 = vmatpush1.msra.mxu0 %v226
    %275 = vmatprep.subr.mxu0 0.0
    %276 = vmatpush1.msra.mxu0 %v225
    %277 = vmatprep.subr.mxu0 0.0
    %278 = vmatpush1.msra.mxu0 %v224
    %279 = vmatprep.subr.mxu0 0.0
    %280 = vmatpush2.msra.mxu0 0.0
    %281 = vmatprep.subr.mxu0 0.0
    %282 = vmatpush2.msra.mxu0 0.0
    %283 = vmatprep.subr.mxu0 0.0
    %284 = vmatpush2.msra.mxu0 0.0
    %285 = vmatprep.subr.mxu0 0.0
    %286 = vmatpush2.msra.mxu0 0.0
    %287 = vmatprep.subr.mxu0 0.0
    %288 = vmatpush2.msra.mxu0 0.0
    %289 = vmatprep.subr.mxu0 0.0
    %290 = vmatpush2.msra.mxu0 0.0
    %291 = vmatprep.subr.mxu0 0.0
    %292 = vmatpush2.msra.mxu0 0.0
    %293 = vmatprep.subr.mxu0 0.0
    %294 = vmatpush2.msra.mxu0 0.0
    %295 = vmatprep.subr.mxu0 0.0
    %296 = vmatpush2.msra.mxu0 0.0
    %297 = vmatprep.subr.mxu0 0.0
    %298 = vmatpush2.msra.mxu0 0.0
    %299 = vmatprep.subr.mxu0 0.0
    %300 = vmatpush2.msra.mxu0 0.0
    %301 = vmatprep.subr.mxu0 0.0
    %302 = vmatpush2.msra.mxu0 0.0
    %303 = vmatprep.subr.mxu0 0.0
    %304 = vmatpush2.msra.mxu0 0.0
    %305 = vmatprep.subr.mxu0 0.0
    %306 = vmatpush2.msra.mxu0 0.0
    %307 = vmatprep.subr.mxu0 0.0
    %308 = vmatpush2.msra.mxu0 0.0
    %309 = vmatprep.subr.mxu0 0.0
    %310 = vmatpush2.msra.mxu0 0.0
    %311 = vmatprep.mubr.f32.mxu0 0.0
    %312 = vmatmul.mubr.f32.gmra.mxu0 %v223
    %v313 = vpop.f32.mrf.mxu0
    %v314 = vadd.f32 %v245, %v313
    %v315 = vpop.f32.mrf.mxu0
    %316 = vdwg.mxu0
    %v317 = vmax.f32 %v314, 0.0
    %318 = vst [vmem:[#allocation8] sm:$0xff] %v317
    // Predicated region
    $region34: #{tpu_custom_call.1} parent=1 // pred_check
      _
    $region35: #{tpu_custom_call.1} parent=1 // pred_check_branch
      %320 = sbr.rel (0) target = $region37
    $region36: #{tpu_custom_call.1} parent=1 // pred_region
      %s322 = ssub.s32 128, 128
      %323 = vsyncadd [#allocation4], %s322
      %s325 = sshll.u32 [#allocation8], 4
      %s326 = int_to_ptr.vmem [resolvable:$true] %s325
      %328 = dma.vmem_to_hbm [thread:$0]  %s326, 128, %s5, [#allocation4]
    $region37: #{tpu_custom_call.1} parent=1 // pred_fallthru
      _
    // Predicated region
    $region38: #{tpu_custom_call.1} parent=1 // pred_check
      _
    $region39: #{tpu_custom_call.1} parent=1 // pred_check_branch
      %330 = sbr.rel (0) target = $region41
    $region40: #{tpu_custom_call.1} parent=1 // pred_region
      %331 = dma.done [#allocation4], 128
    $region41: #{tpu_custom_call.1} parent=1 // pred_fallthru
      _
    %332 = vsyncpa [#allocation3], 1
    %333 = vsyncpa [#allocation6], 1
    %334 = vsyncpa [#allocation4], 1

</llo_original>
